<compile_context>
chip_gen: v5e
topology: v5e:2x2
jax: 0.10.0
libtpu: 0.0.40
codegen_flags: <defaults>
</compile_context>

<pallas_src>
import jax
import jax.numpy as jnp
from jax.experimental import pallas as pl
from jax.experimental.pallas import tpu as pltpu


def stnnn_kernel(x_ref, w1_ref, b1_ref, wc1_ref, bc1_ref,
                 wc2_ref, bc2_ref, w2_ref, b2_ref, o_ref):
    x = x_ref[...]                                                        # (TB, 3)
    w1 = w1_ref[...]                                                      # (3, 32)

    # fc1 + relu -> (TB, 32): K=3 contraction done on the VPU (MXU would be >97% zeros).
    h = (x[:, 0:1] * w1[0:1, :]
         + x[:, 1:2] * w1[1:2, :]
         + x[:, 2:3] * w1[2:3, :]
         + b1_ref[...])
    h = jnp.maximum(h, 0.0)

    # conv1 (center tap, L==1) + relu -> (TB, 64)  [MXU]
    h = jnp.dot(h, wc1_ref[...], preferred_element_type=jnp.float32) + bc1_ref[...]
    h = jnp.maximum(h, 0.0)

    # conv2 (center tap, L==1) + relu -> (TB, 32)  [MXU]
    h = jnp.dot(h, wc2_ref[...], preferred_element_type=jnp.float32) + bc2_ref[...]
    h = jnp.maximum(h, 0.0)

    # fc2 -> (TB, 1): N=1 matmul replaced by VPU mul + XLU lane-reduce.
    o_ref[...] = jnp.sum(h * w2_ref[...], axis=-1, keepdims=True) + b2_ref[0]


def _round_up(n, m):
    return ((n + m - 1) // m) * m


def stnnn_forward(x, params, *, tb=512):
    """Fused forward pass.  tb = batch tile size (sweepable; 512 is a good
    default for v5e/v6e/v7x; clamped down for tiny batches)."""
    w1, b1, wc1, bc1, wc2, bc2, w2, b2 = params
    B = x.shape[0]

    tb = min(tb, _round_up(B, 8))           # keep sublane-aligned, avoid waste at tiny B
    Bp = _round_up(B, tb)

    xp = x.astype(jnp.float32)
    if Bp != B:
        xp = jnp.pad(xp, ((0, Bp - B), (0, 0)))   # pad batch; no in-kernel masking

    # Glue (pure indexing / layout, no compute): transpose weights to (in, out),
    # take center tap of each conv kernel (exact for L == 1, padding == 1).
    args = (
        xp,                                              # (Bp, 3)
        w1.T.astype(jnp.float32),                        # (3, 32)
        b1.reshape(1, -1).astype(jnp.float32),           # (1, 32)
        wc1[:, :, 1].T.astype(jnp.float32),              # (32, 64)
        bc1.reshape(1, -1).astype(jnp.float32),          # (1, 64)
        wc2[:, :, 1].T.astype(jnp.float32),              # (64, 32)
        bc2.reshape(1, -1).astype(jnp.float32),          # (1, 32)
        w2.astype(jnp.float32),                          # (1, 32) row for fc2
        b2.reshape(-1).astype(jnp.float32),              # (1,) scalar -> SMEM
    )

    # Constant-index resident weight/bias blocks (DMA'd once, stay in VMEM).
    def const_spec(shape):
        return pl.BlockSpec(shape, lambda i: (0, 0))

    out = pl.pallas_call(
        stnnn_kernel,
        out_shape=jax.ShapeDtypeStruct((Bp, 1), jnp.float32),
        grid=(Bp // tb,),
        in_specs=[
            pl.BlockSpec((tb, 3), lambda i: (i, 0)),              # x: batch-tiled
            const_spec((3, 32)),                                  # w1
            const_spec((1, 32)),                                  # b1
            const_spec((32, 64)),                                 # wc1 (center tap)
            const_spec((1, 64)),                                  # bc1
            const_spec((64, 32)),                                 # wc2 (center tap)
            const_spec((1, 32)),                                  # bc2
            const_spec((1, 32)),                                  # w2 row
            pl.BlockSpec(memory_space=pltpu.MemorySpace.SMEM),    # b2 scalar
        ],
        out_specs=pl.BlockSpec((tb, 1), lambda i: (i, 0)),
        compiler_params=pltpu.CompilerParams(
            dimension_semantics=("parallel",)),                   # megacore on v7x
    )(*args)

    return out[:B]


def init_params(key):
    # Deterministic, PyTorch-style uniform(-1/sqrt(fan_in), 1/sqrt(fan_in)) init.
    ks = jax.random.split(key, 8)

    def u(k, shape, fan_in):
        bound = 1.0 / jnp.sqrt(jnp.float32(fan_in))
        return jax.random.uniform(k, shape, jnp.float32, -bound, bound)

    w1 = u(ks[0], (32, 3), 3)
    b1 = u(ks[1], (32,), 3)
    wc1 = u(ks[2], (64, 32, 3), 32 * 3)
    bc1 = u(ks[3], (64,), 32 * 3)
    wc2 = u(ks[4], (32, 64, 3), 64 * 3)
    bc2 = u(ks[5], (32,), 64 * 3)
    w2 = u(ks[6], (1, 32), 32)
    b2 = u(ks[7], (1,), 32)
    return (w1, b1, wc1, bc1, wc2, bc2, w2, b2)


def ref_forward(x, params):
    # Pure-JAX reference that runs the *full* Conv1d (padding=1) to validate
    # the center-tap reduction used inside the kernel.
    w1, b1, wc1, bc1, wc2, bc2, w2, b2 = params
    h = jax.nn.relu(x @ w1.T + b1)[:, :, None]                            # (B, 32, 1) NCL
    h = jax.nn.relu(jax.lax.conv_general_dilated(
        h, wc1, window_strides=(1,), padding=((1, 1),),
        dimension_numbers=('NCH', 'OIH', 'NCH')) + bc1[None, :, None])
    h = jax.nn.relu(jax.lax.conv_general_dilated(
        h, wc2, window_strides=(1,), padding=((1, 1),),
        dimension_numbers=('NCH', 'OIH', 'NCH')) + bc2[None, :, None])
    h = h[:, :, 0]                                                        # (B, 32)
    return h @ w2.T + b2


if __name__ == "__main__":
    key = jax.random.PRNGKey(0)
    k_param, k_input = jax.random.split(key)
    params = init_params(k_param)

    B = 8
    x = jax.random.normal(k_input, (B, 3), dtype=jnp.float32)             # (batch, 3)

    out = stnnn_forward(x, params)
    out = jax.block_until_ready(out)

    ref = ref_forward(x, params)
    assert out.shape == (B, 1), out.shape
    assert jnp.allclose(out, ref, atol=1e-5, rtol=1e-5), "mismatch vs reference"

    # Exercise a ragged, multi-tile batch path as well (padding + grid > 1).
    B2 = 1037
    x2 = jax.random.normal(jax.random.PRNGKey(3), (B2, 3), dtype=jnp.float32)
    out2 = jax.block_until_ready(stnnn_forward(x2, params))
    ref2 = ref_forward(x2, params)
    assert out2.shape == (B2, 1), out2.shape
    assert jnp.allclose(out2, ref2, atol=1e-5, rtol=1e-5), "mismatch vs reference (tiled)"

    print("KERNEL_OK")
</pallas_src>

<mosaic_0001>
module attributes {stable_mosaic.version = 11 : i64} {
  func.func @stnnn_kernel(%arg0: i32, %arg1: memref<8x3xf32, #tpu.memory_space<vmem>>, %arg2: memref<3x32xf32, #tpu.memory_space<vmem>>, %arg3: memref<1x32xf32, #tpu.memory_space<vmem>>, %arg4: memref<32x64xf32, #tpu.memory_space<vmem>>, %arg5: memref<1x64xf32, #tpu.memory_space<vmem>>, %arg6: memref<64x32xf32, #tpu.memory_space<vmem>>, %arg7: memref<1x32xf32, #tpu.memory_space<vmem>>, %arg8: memref<1x32xf32, #tpu.memory_space<vmem>>, %arg9: memref<1xf32, #tpu.memory_space<smem>>, %arg10: memref<8x1xf32, #tpu.memory_space<vmem>>) attributes {dimension_semantics = [#tpu.dimension_semantics<parallel>], iteration_bounds = array<i64: 1>, scalar_prefetch = 0 : i64, scratch_operands = 0 : i64, tpu.core_type = #tpu.core_type<tc>, window_params = [{transform_indices = @transform_0, window_bounds = array<i64: 8, 3>}, {pipeline_mode = #tpu.pipeline_mode<synchronous>, transform_indices = @transform_1, window_bounds = array<i64: 3, 32>}, {pipeline_mode = #tpu.pipeline_mode<synchronous>, transform_indices = @transform_2, window_bounds = array<i64: 1, 32>}, {pipeline_mode = #tpu.pipeline_mode<synchronous>, transform_indices = @transform_3, window_bounds = array<i64: 32, 64>}, {pipeline_mode = #tpu.pipeline_mode<synchronous>, transform_indices = @transform_4, window_bounds = array<i64: 1, 64>}, {pipeline_mode = #tpu.pipeline_mode<synchronous>, transform_indices = @transform_5, window_bounds = array<i64: 64, 32>}, {pipeline_mode = #tpu.pipeline_mode<synchronous>, transform_indices = @transform_6, window_bounds = array<i64: 1, 32>}, {pipeline_mode = #tpu.pipeline_mode<synchronous>, transform_indices = @transform_7, window_bounds = array<i64: 1, 32>}, {transform_indices = @transform_8, window_bounds = array<i64: 1>}, {transform_indices = @transform_9, window_bounds = array<i64: 8, 1>}]} {
    %c0 = arith.constant 0 : index
    %c0_0 = arith.constant 0 : index
    %0 = vector.load %arg1[%c0, %c0_0] : memref<8x3xf32, #tpu.memory_space<vmem>>, vector<8x3xf32>
    %c0_1 = arith.constant 0 : index
    %c0_2 = arith.constant 0 : index
    %1 = vector.load %arg2[%c0_1, %c0_2] : memref<3x32xf32, #tpu.memory_space<vmem>>, vector<3x32xf32>
    %2 = vector.extract_strided_slice %0 {offsets = [0, 0], sizes = [8, 1], strides = [1, 1]} : vector<8x3xf32> to vector<8x1xf32>
    %3 = vector.extract_strided_slice %1 {offsets = [0, 0], sizes = [1, 32], strides = [1, 1]} : vector<3x32xf32> to vector<1x32xf32>
    %4 = vector.broadcast %2 : vector<8x1xf32> to vector<8x32xf32>
    %5 = vector.broadcast %3 : vector<1x32xf32> to vector<8x32xf32>
    %6 = arith.mulf %4, %5 : vector<8x32xf32>
    %7 = vector.extract_strided_slice %0 {offsets = [0, 1], sizes = [8, 1], strides = [1, 1]} : vector<8x3xf32> to vector<8x1xf32>
    %8 = vector.extract_strided_slice %1 {offsets = [1, 0], sizes = [1, 32], strides = [1, 1]} : vector<3x32xf32> to vector<1x32xf32>
    %9 = vector.broadcast %7 : vector<8x1xf32> to vector<8x32xf32>
    %10 = vector.broadcast %8 : vector<1x32xf32> to vector<8x32xf32>
    %11 = arith.mulf %9, %10 : vector<8x32xf32>
    %12 = arith.addf %6, %11 : vector<8x32xf32>
    %13 = vector.extract_strided_slice %0 {offsets = [0, 2], sizes = [8, 1], strides = [1, 1]} : vector<8x3xf32> to vector<8x1xf32>
    %14 = vector.extract_strided_slice %1 {offsets = [2, 0], sizes = [1, 32], strides = [1, 1]} : vector<3x32xf32> to vector<1x32xf32>
    %15 = vector.broadcast %13 : vector<8x1xf32> to vector<8x32xf32>
    %16 = vector.broadcast %14 : vector<1x32xf32> to vector<8x32xf32>
    %17 = arith.mulf %15, %16 : vector<8x32xf32>
    %18 = arith.addf %12, %17 : vector<8x32xf32>
    %c0_3 = arith.constant 0 : index
    %c0_4 = arith.constant 0 : index
    %19 = vector.load %arg3[%c0_3, %c0_4] : memref<1x32xf32, #tpu.memory_space<vmem>>, vector<1x32xf32>
    %20 = vector.broadcast %19 : vector<1x32xf32> to vector<8x32xf32>
    %21 = arith.addf %18, %20 : vector<8x32xf32>
    %cst = arith.constant 0.000000e+00 : f32
    %22 = vector.broadcast %cst : f32 to vector<8x32xf32>
    %23 = arith.maximumf %21, %22 : vector<8x32xf32>
    %c0_5 = arith.constant 0 : index
    %c0_6 = arith.constant 0 : index
    %24 = vector.load %arg4[%c0_5, %c0_6] : memref<32x64xf32, #tpu.memory_space<vmem>>, vector<32x64xf32>
    %cst_7 = arith.constant dense<0.000000e+00> : vector<8x64xf32>
    %25 = tpu.matmul %23, %24, %cst_7 {dimension_numbers = #tpu.dot_dimension_numbers<[1], [0], [0], [1], [0, 0, 1, 1], [], []>} : vector<8x32xf32>, vector<32x64xf32>, vector<8x64xf32> -> vector<8x64xf32>
    %c0_8 = arith.constant 0 : index
    %c0_9 = arith.constant 0 : index
    %26 = vector.load %arg5[%c0_8, %c0_9] : memref<1x64xf32, #tpu.memory_space<vmem>>, vector<1x64xf32>
    %27 = vector.broadcast %26 : vector<1x64xf32> to vector<8x64xf32>
    %28 = arith.addf %25, %27 : vector<8x64xf32>
    %cst_10 = arith.constant 0.000000e+00 : f32
    %29 = vector.broadcast %cst_10 : f32 to vector<8x64xf32>
    %30 = arith.maximumf %28, %29 : vector<8x64xf32>
    %c0_11 = arith.constant 0 : index
    %c0_12 = arith.constant 0 : index
    %31 = vector.load %arg6[%c0_11, %c0_12] : memref<64x32xf32, #tpu.memory_space<vmem>>, vector<64x32xf32>
    %cst_13 = arith.constant dense<0.000000e+00> : vector<8x32xf32>
    %32 = tpu.matmul %30, %31, %cst_13 {dimension_numbers = #tpu.dot_dimension_numbers<[1], [0], [0], [1], [0, 0, 1, 1], [], []>} : vector<8x64xf32>, vector<64x32xf32>, vector<8x32xf32> -> vector<8x32xf32>
    %c0_14 = arith.constant 0 : index
    %c0_15 = arith.constant 0 : index
    %33 = vector.load %arg7[%c0_14, %c0_15] : memref<1x32xf32, #tpu.memory_space<vmem>>, vector<1x32xf32>
    %34 = vector.broadcast %33 : vector<1x32xf32> to vector<8x32xf32>
    %35 = arith.addf %32, %34 : vector<8x32xf32>
    %cst_16 = arith.constant 0.000000e+00 : f32
    %36 = vector.broadcast %cst_16 : f32 to vector<8x32xf32>
    %37 = arith.maximumf %35, %36 : vector<8x32xf32>
    %c0_17 = arith.constant 0 : index
    %c0_18 = arith.constant 0 : index
    %38 = vector.load %arg8[%c0_17, %c0_18] : memref<1x32xf32, #tpu.memory_space<vmem>>, vector<1x32xf32>
    %39 = vector.broadcast %38 : vector<1x32xf32> to vector<8x32xf32>
    %40 = arith.mulf %37, %39 : vector<8x32xf32>
    %cst_19 = arith.constant dense<0.000000e+00> : vector<8xf32>
    %41 = vector.multi_reduction <add>, %40, %cst_19 [1] : vector<8x32xf32> to vector<8xf32>
    %42 = vector.shape_cast %41 : vector<8xf32> to vector<8x1xf32>
    %c0_20 = arith.constant 0 : index
    %43 = memref.load %arg9[%c0_20] : memref<1xf32, #tpu.memory_space<smem>>
    %44 = vector.broadcast %43 : f32 to vector<8x1xf32>
    %45 = arith.addf %42, %44 : vector<8x1xf32>
    %c0_21 = arith.constant 0 : index
    %c0_22 = arith.constant 0 : index
    %46 = vector.load %arg10[%c0_21, %c0_22] : memref<8x1xf32, #tpu.memory_space<vmem>>, vector<8x1xf32>
    tpu.vector_store %arg10[%c0_21, %c0_22], %45 {strides = array<i32>} : memref<8x1xf32, #tpu.memory_space<vmem>>, vector<8x1xf32>,
    return
  }
  func.func @transform_0(%arg0: i32) -> (i32, i32) {
    %c0_i32 = arith.constant 0 : i32
    %c0_i32_0 = arith.constant 0 : i32
    return %arg0, %c0_i32 : i32, i32
  }
  func.func @transform_1(%arg0: i32) -> (i32, i32) {
    %c0_i32 = arith.constant 0 : i32
    %c0_i32_0 = arith.constant 0 : i32
    %c0_i32_1 = arith.constant 0 : i32
    return %c0_i32, %c0_i32_0 : i32, i32
  }
  func.func @transform_2(%arg0: i32) -> (i32, i32) {
    %c0_i32 = arith.constant 0 : i32
    %c0_i32_0 = arith.constant 0 : i32
    %c0_i32_1 = arith.constant 0 : i32
    return %c0_i32, %c0_i32_0 : i32, i32
  }
  func.func @transform_3(%arg0: i32) -> (i32, i32) {
    %c0_i32 = arith.constant 0 : i32
    %c0_i32_0 = arith.constant 0 : i32
    %c0_i32_1 = arith.constant 0 : i32
    return %c0_i32, %c0_i32_0 : i32, i32
  }
  func.func @transform_4(%arg0: i32) -> (i32, i32) {
    %c0_i32 = arith.constant 0 : i32
    %c0_i32_0 = arith.constant 0 : i32
    %c0_i32_1 = arith.constant 0 : i32
    return %c0_i32, %c0_i32_0 : i32, i32
  }
  func.func @transform_5(%arg0: i32) -> (i32, i32) {
    %c0_i32 = arith.constant 0 : i32
    %c0_i32_0 = arith.constant 0 : i32
    %c0_i32_1 = arith.constant 0 : i32
    return %c0_i32, %c0_i32_0 : i32, i32
  }
  func.func @transform_6(%arg0: i32) -> (i32, i32) {
    %c0_i32 = arith.constant 0 : i32
    %c0_i32_0 = arith.constant 0 : i32
    %c0_i32_1 = arith.constant 0 : i32
    return %c0_i32, %c0_i32_0 : i32, i32
  }
  func.func @transform_7(%arg0: i32) -> (i32, i32) {
    %c0_i32 = arith.constant 0 : i32
    %c0_i32_0 = arith.constant 0 : i32
    %c0_i32_1 = arith.constant 0 : i32
    return %c0_i32, %c0_i32_0 : i32, i32
  }
  func.func @transform_8(%arg0: i32) -> i32 {
    %c0_i32 = arith.constant 0 : i32
    %c0_i32_0 = arith.constant 0 : i32
    return %c0_i32 : i32
  }
  func.func @transform_9(%arg0: i32) -> (i32, i32) {
    %c0_i32 = arith.constant 0 : i32
    %c0_i32_0 = arith.constant 0 : i32
    return %arg0, %c0_i32 : i32, i32
  }
}

</mosaic_0001>

<llo_original>
// kernel: tpu_custom_call.1
$region0: #{tpu_custom_call.1}
  #allocation0 [shape = 'u32[]', space=smem, size = 0x4, offset = 0x4, fixed_abs, tag = 'smem constant byte address 0x4 - core index']
  #allocation1 [shape = 'u32[72,128]{1,0:T(1,128)}', space=vmem, size = 0x9000, scoped, tag = 'internal scratch']
  #allocation2 [shape = 'f32[1]{0:T(128)S(6)}', space=smem, size = 0x200, scoped, tag = 'scoped memory for tpu_custom_call.1']
  %s0 = inlined_call_operand.vmem [shape: f32[8,3], index: 0, kind: input, shape index: {}]
  %s1 = inlined_call_operand.vmem [shape: f32[3,32], index: 1, kind: input, shape index: {}]
  %s2 = inlined_call_operand.vmem [shape: f32[1,32], index: 2, kind: input, shape index: {}]
  %s3 = inlined_call_operand.vmem [shape: f32[32,64], index: 3, kind: input, shape index: {}]
  %s4 = inlined_call_operand.vmem [shape: f32[1,64], index: 4, kind: input, shape index: {}]
  %s5 = inlined_call_operand.vmem [shape: f32[64,32], index: 5, kind: input, shape index: {}]
  %s6 = inlined_call_operand.vmem [shape: f32[1,32], index: 6, kind: input, shape index: {}]
  %s7 = inlined_call_operand.vmem [shape: f32[1,32], index: 7, kind: input, shape index: {}]
  %s8 = inlined_call_operand.<no memory space> [shape: f32[1], index: 8, kind: input, shape index: {}]
  %s9 = inlined_call_operand.vmem [shape: f32[8,1], index: 9, kind: output, shape index: {}]
  %s10 = sld [smem:[#allocation0]]
  $region46: #{tpu_custom_call.1} parent=0
    _
  %s12 = ssub.s32 1, %s10
  %s13 = scalar_select 0, %s12, %s10
  %14 = sst [smem:[#allocation2]] %s8
  // Predicated region
  $region2: #{tpu_custom_call.1} parent=0 // pred_check
    _
  $region3: #{tpu_custom_call.1} parent=0 // pred_check_branch
    %16 = sbr.rel (0) target = $region5
  $region4: #{tpu_custom_call.1} parent=0 // pred_region
    _
  $region5: #{tpu_custom_call.1} parent=0 // pred_fallthru
    _
  // Predicated region
  $region6: #{tpu_custom_call.1} parent=0 // pred_check
    _
  $region7: #{tpu_custom_call.1} parent=0 // pred_check_branch
    %18 = sbr.rel (0) target = $region9
  $region8: #{tpu_custom_call.1} parent=0 // pred_region
    _
  $region9: #{tpu_custom_call.1} parent=0 // pred_fallthru
    _
  // Predicated region
  $region10: #{tpu_custom_call.1} parent=0 // pred_check
    _
  $region11: #{tpu_custom_call.1} parent=0 // pred_check_branch
    %20 = sbr.rel (0) target = $region13
  $region12: #{tpu_custom_call.1} parent=0 // pred_region
    _
  $region13: #{tpu_custom_call.1} parent=0 // pred_fallthru
    _
  // Predicated region
  $region14: #{tpu_custom_call.1} parent=0 // pred_check
    _
  $region15: #{tpu_custom_call.1} parent=0 // pred_check_branch
    %22 = sbr.rel (0) target = $region17
  $region16: #{tpu_custom_call.1} parent=0 // pred_region
    _
  $region17: #{tpu_custom_call.1} parent=0 // pred_fallthru
    _
  // Predicated region
  $region18: #{tpu_custom_call.1} parent=0 // pred_check
    _
  $region19: #{tpu_custom_call.1} parent=0 // pred_check_branch
    %24 = sbr.rel (0) target = $region21
  $region20: #{tpu_custom_call.1} parent=0 // pred_region
    _
  $region21: #{tpu_custom_call.1} parent=0 // pred_fallthru
    _
  // Predicated region
  $region22: #{tpu_custom_call.1} parent=0 // pred_check
    _
  $region23: #{tpu_custom_call.1} parent=0 // pred_check_branch
    %26 = sbr.rel (0) target = $region25
  $region24: #{tpu_custom_call.1} parent=0 // pred_region
    _
  $region25: #{tpu_custom_call.1} parent=0 // pred_fallthru
    _
  // Predicated region
  $region26: #{tpu_custom_call.1} parent=0 // pred_check
    _
  $region27: #{tpu_custom_call.1} parent=0 // pred_check_branch
    %28 = sbr.rel (0) target = $region29
  $region28: #{tpu_custom_call.1} parent=0 // pred_region
    _
  $region29: #{tpu_custom_call.1} parent=0 // pred_fallthru
    _
  // Predicated region
  $region30: #{tpu_custom_call.1} parent=0 // pred_check
    _
  $region31: #{tpu_custom_call.1} parent=0 // pred_check_branch
    %30 = sbr.rel (0) target = $region33
  $region32: #{tpu_custom_call.1} parent=0 // pred_region
    _
  $region33: #{tpu_custom_call.1} parent=0 // pred_fallthru
    _
  // Predicated region
  $region34: #{tpu_custom_call.1} parent=0 // pred_check
    _
  $region35: #{tpu_custom_call.1} parent=0 // pred_check_branch
    %32 = sbr.rel (0) target = $region37
  $region36: #{tpu_custom_call.1} parent=0 // pred_region
    _
  $region37: #{tpu_custom_call.1} parent=0 // pred_fallthru
    _
  %v33 = vld [vmem:[%s0] sm:$0xff]
  %v34 = vld [vmem:[%s1] sm:$0x7]
  %36 = vset.pattern.permute.xlu0 0
  %37 = vperm.xlu0 %36, %v33
  %v38 = vpop.permute.xlu0 %37
  %v40 = vperm.slane %v34, 0
  %v41 = vmul.f32 %v38, %v40
  %42 = vset.pattern.permute.xlu0 1
  %43 = vperm.xlu0 %42, %v33
  %v44 = vpop.permute.xlu0 %43
  %v46 = vperm.slane %v34, 1
  %v47 = vmul.f32 %v44, %v46
  %v48 = vadd.f32 %v41, %v47
  %49 = vset.pattern.permute.xlu0 2
  %50 = vperm.xlu0 %49, %v33
  %v51 = vpop.permute.xlu0 %50
  %v53 = vperm.slane %v34, 2
  %v54 = vmul.f32 %v51, %v53
  %v55 = vadd.f32 %v48, %v54
  %v56 = vld [vmem:[%s2] sm:$0x1]
  %v58 = vperm.slane %v56, 0
  %v60 = vadd.f32 %v55, %v58
  %v61 = vmax.f32 %v60, 0.0
  %v62 = vld [vmem:[%s3] sm:$0xff]
  %v63 = vld [vmem:[%s3 + $0x8] sm:$0xff]
  %v64 = vld [vmem:[%s3 + $0x10] sm:$0xff]
  %v65 = vld [vmem:[%s3 + $0x18] sm:$0xff]
  %v66 = vld [vmem:[%s4] sm:$0x1]
  %v68 = vperm.slane %v66, 0
  %vm70 = vcmask 261120
  %v72 = vsel %vm70, %v61, 0
  %74 = vmatpush.msra.mxu0 0.0
  %75 = vmatpush.msra.mxu0 0.0
  %76 = vmatpush.msra.mxu0 0.0
  %77 = vmatpush.msra.mxu0 0.0
  %78 = vmatpush.msra.mxu0 0.0
  %79 = vmatpush.msra.mxu0 0.0
  %80 = vmatpush.msra.mxu0 0.0
  %81 = vmatpush.msra.mxu0 0.0
  %82 = vmatpush.msra.mxu0 0.0
  %83 = vmatpush.msra.mxu0 0.0
  %84 = vmatpush.msra.mxu0 0.0
  %85 = vmatpush.msra.mxu0 0.0
  %86 = vmatpush.msra.mxu0 %v65
  %87 = vmatpush.msra.mxu0 %v64
  %88 = vmatpush.msra.mxu0 %v63
  %89 = vmatpush.msra.mxu0 %v62
  %90 = vmatmul.f32.gmra.mxu0 %v72
  %v91 = vpop.f32.mrf.mxu0
  %v92 = vadd.f32 %v68, %v91
  %93 = vdwg.mxu0
  %v94 = vmax.f32 %v92, 0.0
  %v95 = vld [vmem:[%s5] sm:$0xff]
  %v96 = vld [vmem:[%s5 + $0x8] sm:$0xff]
  %v97 = vld [vmem:[%s5 + $0x10] sm:$0xff]
  %v98 = vld [vmem:[%s5 + $0x18] sm:$0xff]
  %v99 = vld [vmem:[%s5 + $0x20] sm:$0xff]
  %v100 = vld [vmem:[%s5 + $0x28] sm:$0xff]
  %v101 = vld [vmem:[%s5 + $0x30] sm:$0xff]
  %v102 = vld [vmem:[%s5 + $0x38] sm:$0xff]
  %v103 = vld [vmem:[%s6] sm:$0x1]
  %v105 = vperm.slane %v103, 0
  %vm107 = vcmask 523264
  %v109 = vsel %vm107, %v94, 0
  %111 = vmatpush.msra.mxu0 0.0
  %112 = vmatpush.msra.mxu0 0.0
  %113 = vmatpush.msra.mxu0 0.0
  %114 = vmatpush.msra.mxu0 0.0
  %115 = vmatpush.msra.mxu0 0.0
  %116 = vmatpush.msra.mxu0 0.0
  %117 = vmatpush.msra.mxu0 0.0
  %118 = vmatpush.msra.mxu0 0.0
  %119 = vmatpush.msra.mxu0 %v102
  %120 = vmatpush.msra.mxu0 %v101
  %121 = vmatpush.msra.mxu0 %v100
  %122 = vmatpush.msra.mxu0 %v99
  %123 = vmatpush.msra.mxu0 %v98
  %124 = vmatpush.msra.mxu0 %v97
  %125 = vmatpush.msra.mxu0 %v96
  %126 = vmatpush.msra.mxu0 %v95
  %127 = vmatmul.f32.gmra.mxu0 %v109
  %v128 = vpop.f32.mrf.mxu0
  %v129 = vadd.f32 %v105, %v128
  %130 = vdwg.mxu0
  %v131 = vmax.f32 %v129, 0.0
  %v132 = vld [vmem:[%s7] sm:$0x1]
  %v134 = vperm.slane %v132, 0
  %v136 = vmul.f32 %v131, %v134
  %v137 = vsel %vm70, %v136, 0.0
  %138 = vadd.xlane.f32.xlu0 %v137
  %v139 = vpop.xlane.xlu0 %138
  %s140 = sld [smem:[#allocation2]]
  %v141 = vstv %s140
  %v142 = vadd.f32 %v139, %v141
  %vm143 = vcmask 7168
  %144 = vst.msk [vmem:[%s9] sm:$0xff] %vm143, %v142
  // Predicated region
  $region38: #{tpu_custom_call.1} parent=0 // pred_check
    _
  $region39: #{tpu_custom_call.1} parent=0 // pred_check_branch
    %146 = sbr.rel (0) target = $region41
  $region40: #{tpu_custom_call.1} parent=0 // pred_region
    _
  $region41: #{tpu_custom_call.1} parent=0 // pred_fallthru
    _
  // Predicated region
  $region42: #{tpu_custom_call.1} parent=0 // pred_check
    _
  $region43: #{tpu_custom_call.1} parent=0 // pred_check_branch
    %148 = sbr.rel (0) target = $region45
  $region44: #{tpu_custom_call.1} parent=0 // pred_region
    _
  $region45: #{tpu_custom_call.1} parent=0 // pred_fallthru
    _

</llo_original>
